<compile_context>
chip_gen: v5e
topology: v5e:2x2
jax: 0.10.0
libtpu: 0.0.40
codegen_flags: <defaults>
</compile_context>

<pallas_src>
import jax
import jax.numpy as jnp
from jax.experimental import pallas as pl
from jax.experimental.pallas import tpu as pltpu

_LANE = 128


def _round_up(n, m):
    return ((n + m - 1) // m) * m


def _linreg_kernel(x_ref, w_ref, b_ref, o_ref, acc_ref):
    d = pl.program_id(1)

    @pl.when(d == 0)
    def _init():
        acc_ref[...] = jnp.zeros_like(acc_ref)

    # (1, td) . (tb, td)^T -> (1, tb): lane-dense output row.  X stays in its
    # native dtype (bf16 feeds the MXU directly); accumulate in f32.
    acc_ref[...] += jax.lax.dot_general(
        w_ref[...], x_ref[...],
        dimension_numbers=(((1,), (1,)), ((), ())),
        preferred_element_type=jnp.float32,
    )

    @pl.when(d == pl.num_programs(1) - 1)
    def _finalize():
        o_ref[...] = (acc_ref[...] + b_ref[0]).astype(o_ref.dtype)


def _choose_tiles(B, D, itemsize, *, x_budget_bytes, min_batch_steps):
    """Pick (tb, td): rows / feature columns per X tile, bytes-based."""
    lane = _LANE
    # Feature tile: full D unless even a minimum-height (128-row) tile would
    # blow the per-buffer budget AND D splits into 128-multiples that divide it
    # exactly (partial blocks along a reduction axis would be unsafe).
    td = D
    if D % lane == 0 and lane * D * itemsize > x_budget_bytes:
        m = D // lane
        target = max(1, x_budget_bytes // (lane * lane * itemsize))
        t = 1
        for cand in range(min(m, target), 0, -1):
            if m % cand == 0:
                t = cand
                break
        td = lane * t
    # TODO(synk): very wide D that is not a multiple of 128 stays un-split and
    # relies on the raised vmem_limit_bytes below.

    # Batch tile: as many 128-row groups as fit the per-buffer budget.  Use the
    # lane-padded width (a (tb, 32) tile still occupies tb*128 f32 in VMEM).
    td_pad = _round_up(td, lane)
    tb = max(lane, (x_budget_bytes // (td_pad * itemsize)) // lane * lane)
    tb = min(tb, _round_up(B, lane))
    # Keep >= min_batch_steps batch tiles (when B is big enough) so the
    # "parallel" axis can actually be split across v7x's two TensorCores.
    if B >= min_batch_steps * lane:
        tb = min(tb, max(lane, _round_up(pl.cdiv(B, min_batch_steps), lane)))
    return tb, td


def linreg_forward(x, weight, bias, *,
                   x_budget_bytes=8 << 20,    # per pipeline buffer of X
                   min_batch_steps=8,         # grid-step floor (v7x megacore)
                   xla_fallback_bytes=1 << 20):
    """x: (B, D) float; weight: (1, D) (PyTorch nn.Linear layout); bias: (1,)."""
    B, D = x.shape
    itemsize = jnp.dtype(x.dtype).itemsize
    w_row = weight.reshape(1, D).astype(x.dtype)     # lane-dense, native dtype
    b_vec = bias.reshape(1).astype(jnp.float32)      # SMEM scalar

    # Tiny-input fast path: fixed pallas_call overhead dominates below ~1 MiB.
    if B * D * itemsize < xla_fallback_bytes:
        y = jnp.dot(x, w_row.T, preferred_element_type=jnp.float32)
        return (y + b_vec[0]).astype(jnp.float32)

    tb, td = _choose_tiles(B, D, itemsize,
                           x_budget_bytes=x_budget_bytes,
                           min_batch_steps=min_batch_steps)
    nb = pl.cdiv(B, tb)
    nd = pl.cdiv(D, td)        # td divides D by construction

    out_row = pl.pallas_call(
        _linreg_kernel,
        out_shape=jax.ShapeDtypeStruct((1, nb * tb), jnp.float32),
        grid=(nb, nd),
        in_specs=[
            pl.BlockSpec((tb, td), lambda i, d: (i, d)),         # X tile (partial tail OK)
            pl.BlockSpec((1, td), lambda i, d: (0, d)),          # W row slice (resident)
            pl.BlockSpec(memory_space=pltpu.MemorySpace.SMEM),   # bias scalar
        ],
        out_specs=pl.BlockSpec((1, tb), lambda i, d: (0, i)),    # lane-dense row
        scratch_shapes=[pltpu.VMEM((1, tb), jnp.float32)],       # f32 accumulator
        compiler_params=pltpu.CompilerParams(
            dimension_semantics=("parallel", "arbitrary"),
            vmem_limit_bytes=32 * 1024 * 1024,
        ),
        cost_estimate=pl.CostEstimate(
            flops=2 * B * D,
            transcendentals=0,
            bytes_accessed=B * D * itemsize + D * itemsize + 4 * (nb * tb + 1),
        ),
    )(x, w_row, b_vec)

    # Padded output lanes (>= B, from the partial final batch block) are dropped.
    return out_row[0, :B].reshape(B, 1)


if __name__ == "__main__":
    key = jax.random.PRNGKey(0)
    kx1, kx2, kx3, kx4, kw, kw3, kb = jax.random.split(key, 7)

    D = 32
    bound = 1.0 / (D ** 0.5)                 # PyTorch nn.Linear default init
    weight = jax.random.uniform(kw, (1, D), jnp.float32, -bound, bound)
    bias = jax.random.uniform(kb, (1,), jnp.float32, -bound, bound)

    def ref(x, w, b):
        return x.astype(jnp.float32) @ w.astype(jnp.float32).T + b

    # 1) tiny batch (single partial tile), Pallas path forced.
    x1 = jax.random.normal(kx1, (8, D), jnp.float32)
    o1 = jax.block_until_ready(linreg_forward(x1, weight, bias, xla_fallback_bytes=0))
    assert o1.shape == (8, 1)
    assert jnp.allclose(o1, ref(x1, weight, bias), atol=1e-2, rtol=1e-2)

    # 2) ragged batch (no padding copy of X; tail lanes sliced off).
    x2 = jax.random.normal(kx2, (300, D), jnp.float32)
    o2 = jax.block_until_ready(linreg_forward(x2, weight, bias, xla_fallback_bytes=0))
    assert o2.shape == (300, 1)
    assert jnp.allclose(o2, ref(x2, weight, bias), atol=1e-2, rtol=1e-2)

    # 3) wide D with a forced feature split (exercises the D-axis accumulator).
    D3 = 512
    b3 = 1.0 / (D3 ** 0.5)
    weight3 = jax.random.uniform(kw3, (1, D3), jnp.float32, -b3, b3)
    x3 = jax.random.normal(kx3, (1024, D3), jnp.float32)
    o3 = jax.block_until_ready(linreg_forward(
        x3, weight3, bias, x_budget_bytes=128 * 1024, xla_fallback_bytes=0))
    assert o3.shape == (1024, 1)
    assert jnp.allclose(o3, ref(x3, weight3, bias), atol=1e-2, rtol=1e-2)

    # 4) bf16 input: native-dtype DMA + MXU feed, f32 accumulate.
    D4 = 256
    b4 = 1.0 / (D4 ** 0.5)
    weight4 = jax.random.uniform(kw3, (1, D4), jnp.float32, -b4, b4)
    x4 = jax.random.normal(kx4, (256, D4), jnp.float32).astype(jnp.bfloat16)
    o4 = jax.block_until_ready(linreg_forward(x4, weight4, bias, xla_fallback_bytes=0))
    ref4 = ref(x4, weight4.astype(jnp.bfloat16), bias)
    assert o4.shape == (256, 1)
    assert jnp.allclose(o4, ref4, atol=1e-2, rtol=1e-2)

    # 5) tiny-input XLA fast path agrees with the kernel path.
    o1_fast = jax.block_until_ready(linreg_forward(x1, weight, bias))
    assert jnp.allclose(o1_fast, o1, atol=1e-2, rtol=1e-2)

    print("KERNEL_OK")
</pallas_src>

<mosaic_0001>
module attributes {stable_mosaic.version = 11 : i64} {
  func.func @_linreg_kernel(%arg0: i32, %arg1: i32, %arg2: memref<128x32xf32, #tpu.memory_space<vmem>>, %arg3: memref<1x32xf32, #tpu.memory_space<vmem>>, %arg4: memref<1xf32, #tpu.memory_space<smem>>, %arg5: memref<1x128xf32, #tpu.memory_space<vmem>>, %arg6: memref<1x128xf32, #tpu.memory_space<vmem>>) attributes {dimension_semantics = [#tpu.dimension_semantics<parallel>, #tpu.dimension_semantics<arbitrary>], iteration_bounds = array<i64: 1, 1>, scalar_prefetch = 0 : i64, scratch_operands = 1 : i64, tpu.core_type = #tpu.core_type<tc>, window_params = [{transform_indices = @transform_0, window_bounds = array<i64: 128, 32>}, {transform_indices = @transform_1, window_bounds = array<i64: 1, 32>}, {transform_indices = @transform_2, window_bounds = array<i64: 1>}, {transform_indices = @transform_3, window_bounds = array<i64: 1, 128>}]} {
    %c0_i32 = arith.constant 0 : i32
    %0 = arith.cmpi eq, %arg1, %c0_i32 : i32
    %1 = arith.extui %0 : i1 to i32
    %c0_i32_0 = arith.constant 0 : i32
    %2 = arith.cmpi ne, %1, %c0_i32_0 : i32
    scf.if %2 {
      %cst_10 = arith.constant 0.000000e+00 : f32
      %12 = vector.broadcast %cst_10 : f32 to vector<1x128xf32>
      %c0_11 = arith.constant 0 : index
      %c0_12 = arith.constant 0 : index
      %13 = vector.load %arg6[%c0_11, %c0_12] : memref<1x128xf32, #tpu.memory_space<vmem>>, vector<1x128xf32>
      tpu.vector_store %arg6[%c0_11, %c0_12], %12 {strides = array<i32>} : memref<1x128xf32, #tpu.memory_space<vmem>>, vector<1x128xf32>,
    } else {
    }
    %c0 = arith.constant 0 : index
    %c0_1 = arith.constant 0 : index
    %3 = vector.load %arg6[%c0, %c0_1] : memref<1x128xf32, #tpu.memory_space<vmem>>, vector<1x128xf32>
    %c0_2 = arith.constant 0 : index
    %c0_3 = arith.constant 0 : index
    %4 = vector.load %arg3[%c0_2, %c0_3] : memref<1x32xf32, #tpu.memory_space<vmem>>, vector<1x32xf32>
    %c0_4 = arith.constant 0 : index
    %c0_5 = arith.constant 0 : index
    %5 = vector.load %arg2[%c0_4, %c0_5] : memref<128x32xf32, #tpu.memory_space<vmem>>, vector<128x32xf32>
    %cst = arith.constant dense<0.000000e+00> : vector<1x128xf32>
    %6 = tpu.matmul %4, %5, %cst {dimension_numbers = #tpu.dot_dimension_numbers<[1], [1], [0], [0], [0, 0, 1, 0], [], []>} : vector<1x32xf32>, vector<128x32xf32>, vector<1x128xf32> -> vector<1x128xf32>
    %7 = arith.addf %3, %6 : vector<1x128xf32>
    %c0_6 = arith.constant 0 : index
    %c0_7 = arith.constant 0 : index
    %8 = vector.load %arg6[%c0_6, %c0_7] : memref<1x128xf32, #tpu.memory_space<vmem>>, vector<1x128xf32>
    tpu.vector_store %arg6[%c0_6, %c0_7], %7 {strides = array<i32>} : memref<1x128xf32, #tpu.memory_space<vmem>>, vector<1x128xf32>,
    %c0_i32_8 = arith.constant 0 : i32
    %9 = arith.cmpi eq, %arg1, %c0_i32_8 : i32
    %10 = arith.extui %9 : i1 to i32
    %c0_i32_9 = arith.constant 0 : i32
    %11 = arith.cmpi ne, %10, %c0_i32_9 : i32
    scf.if %11 {
      %c0_10 = arith.constant 0 : index
      %c0_11 = arith.constant 0 : index
      %12 = vector.load %arg6[%c0_10, %c0_11] : memref<1x128xf32, #tpu.memory_space<vmem>>, vector<1x128xf32>
      %c0_12 = arith.constant 0 : index
      %13 = memref.load %arg4[%c0_12] : memref<1xf32, #tpu.memory_space<smem>>
      %14 = vector.broadcast %13 : f32 to vector<1x128xf32>
      %15 = arith.addf %12, %14 : vector<1x128xf32>
      %c0_13 = arith.constant 0 : index
      %c0_14 = arith.constant 0 : index
      %16 = vector.load %arg5[%c0_13, %c0_14] : memref<1x128xf32, #tpu.memory_space<vmem>>, vector<1x128xf32>
      tpu.vector_store %arg5[%c0_13, %c0_14], %15 {strides = array<i32>} : memref<1x128xf32, #tpu.memory_space<vmem>>, vector<1x128xf32>,
    } else {
    }
    return
  }
  func.func @transform_0(%arg0: i32, %arg1: i32) -> (i32, i32) {
    %c0_i32 = arith.constant 0 : i32
    return %arg0, %arg1 : i32, i32
  }
  func.func @transform_1(%arg0: i32, %arg1: i32) -> (i32, i32) {
    %c0_i32 = arith.constant 0 : i32
    %c0_i32_0 = arith.constant 0 : i32
    return %c0_i32, %arg1 : i32, i32
  }
  func.func @transform_2(%arg0: i32, %arg1: i32) -> i32 {
    %c0_i32 = arith.constant 0 : i32
    %c0_i32_0 = arith.constant 0 : i32
    return %c0_i32 : i32
  }
  func.func @transform_3(%arg0: i32, %arg1: i32) -> (i32, i32) {
    %c0_i32 = arith.constant 0 : i32
    %c0_i32_0 = arith.constant 0 : i32
    return %c0_i32, %arg0 : i32, i32
  }
}

</mosaic_0001>

<llo_original>
// kernel: tpu_custom_call.1
$region0: #{tpu_custom_call.1}
  #allocation0 [shape = 'u32[]', space=smem, size = 0x4, offset = 0x4, fixed_abs, tag = 'smem constant byte address 0x4 - core index']
  #allocation1 [shape = 'u32[72,128]{1,0:T(1,128)}', space=vmem, size = 0x9000, scoped, tag = 'internal scratch']
  #allocation2 [shape = 'f32[1,128]{1,0:T(1,128)}', space=vmem, size = 0x200, scoped, tag = 'scratch operand']
  #allocation3 [shape = 'f32[1]{0:T(128)S(6)}', space=smem, size = 0x200, scoped, tag = 'scoped memory for tpu_custom_call.1']
  %s0 = inlined_call_operand.hbm [shape: f32[8,32], index: 0, kind: input, shape index: {}]
  %s1 = inlined_call_operand.vmem [shape: f32[1,32], index: 1, kind: input, shape index: {}]
  %s2 = inlined_call_operand.<no memory space> [shape: f32[1], index: 2, kind: input, shape index: {}]
  %s3 = inlined_call_operand.hbm [shape: f32[1,128], index: 3, kind: output, shape index: {}]
  %s4 = sld [smem:[#allocation0]]
  $region34: #{tpu_custom_call.1} parent=0
    _
  %s6 = ssub.s32 1, %s4
  %s7 = scalar_select 0, %s6, %s4
  %8 = sst [smem:[#allocation3]] %s2
  $region1: #{tpu_custom_call.1} parent=0
    #allocation4 [shape = 'u8[65536]{0}', space=vmem, size = 0x10000, scoped, tag = 'input window, operand 0, single buffered']
    #allocation5 [shape = 's32[1]{0}', space=sflag, size = 0x4, scoped, tag = 'scoped memory for tpu_custom_call.1']
    #allocation6 [shape = 's32[1]{0}', space=sflag, size = 0x4, scoped, tag = 'scoped memory for tpu_custom_call.1']
    #allocation7 [shape = 'u8[512]{0}', space=vmem, size = 0x400, scoped, tag = 'output window, operand 0, single buffered']
    %9 = vsyncpa [#allocation5], 0
    %10 = vsyncpa [#allocation6], 0
    // Predicated region
    $region2: #{tpu_custom_call.1} parent=1 // pred_check
      _
    $region3: #{tpu_custom_call.1} parent=1 // pred_check_branch
      %12 = sbr.rel (0) target = $region5
    $region4: #{tpu_custom_call.1} parent=1 // pred_region
      %14 = vsyncadd [#allocation5], 1920
      %s15 = sshll.u32 %s0, 4
      %s16 = int_to_ptr.hbm [resolvable:$true] %s15
      %s17 = sshll.u32 [#allocation4], 4
      %s18 = int_to_ptr.vmem [resolvable:$true] %s17
      %23 = dma.hbm_to_vmem [thread:$0]  %s16, 128, %s18, [#allocation5], 128, 128, 8
    $region5: #{tpu_custom_call.1} parent=1 // pred_fallthru
      _
    // Predicated region
    $region6: #{tpu_custom_call.1} parent=1 // pred_check
      _
    $region7: #{tpu_custom_call.1} parent=1 // pred_check_branch
      %25 = sbr.rel (0) target = $region9
    $region8: #{tpu_custom_call.1} parent=1 // pred_region
      _
    $region9: #{tpu_custom_call.1} parent=1 // pred_fallthru
      _
    // Predicated region
    $region10: #{tpu_custom_call.1} parent=1 // pred_check
      _
    $region11: #{tpu_custom_call.1} parent=1 // pred_check_branch
      %27 = sbr.rel (0) target = $region13
    $region12: #{tpu_custom_call.1} parent=1 // pred_region
      _
    $region13: #{tpu_custom_call.1} parent=1 // pred_fallthru
      _
    // Predicated region
    $region14: #{tpu_custom_call.1} parent=1 // pred_check
      _
    $region15: #{tpu_custom_call.1} parent=1 // pred_check_branch
      %29 = sbr.rel (0) target = $region17
    $region16: #{tpu_custom_call.1} parent=1 // pred_region
      %31 = dma.done [#allocation5], 2048
    $region17: #{tpu_custom_call.1} parent=1 // pred_fallthru
      _
    %p32 = scmp.eq.s32.totalorder 0, 0
    // Predicated region
    $region18: #{tpu_custom_call.1} parent=1 // pred_check
      %p33 = pneg %p32
    $region19: #{tpu_custom_call.1} parent=1 // pred_check_branch
      %35 = sbr.rel (%p33) target = $region21
    $region20: #{tpu_custom_call.1} parent=1 // pred_region
      %36 = vst [vmem:[#allocation2] sm:$0x1] 0.0
    $region21: #{tpu_custom_call.1} parent=1 // pred_fallthru
      _
    %v37 = vld [vmem:[#allocation2] sm:$0x1]
    %v38 = vld [vmem:[%s1] sm:$0x1]
    %v39 = vld [vmem:[#allocation4] sm:$0xff]
    %v40 = vld [vmem:[#allocation4 + $0x8] sm:$0xff]
    %v41 = vld [vmem:[#allocation4 + $0x10] sm:$0xff]
    %v42 = vld [vmem:[#allocation4 + $0x18] sm:$0xff]
    %v43 = vld [vmem:[#allocation4 + $0x20] sm:$0xff]
    %v44 = vld [vmem:[#allocation4 + $0x28] sm:$0xff]
    %v45 = vld [vmem:[#allocation4 + $0x30] sm:$0xff]
    %v46 = vld [vmem:[#allocation4 + $0x38] sm:$0xff]
    %v47 = vld [vmem:[#allocation4 + $0x40] sm:$0xff]
    %v48 = vld [vmem:[#allocation4 + $0x48] sm:$0xff]
    %v49 = vld [vmem:[#allocation4 + $0x50] sm:$0xff]
    %v50 = vld [vmem:[#allocation4 + $0x58] sm:$0xff]
    %v51 = vld [vmem:[#allocation4 + $0x60] sm:$0xff]
    %v52 = vld [vmem:[#allocation4 + $0x68] sm:$0xff]
    %v53 = vld [vmem:[#allocation4 + $0x70] sm:$0xff]
    %v54 = vld [vmem:[#allocation4 + $0x78] sm:$0xff]
    %vm55 = vcmask 261120
    %v57 = vsel %vm55, %v38, 0
    %v60 = vsel %vm55, %v39, 0
    %v63 = vsel %vm55, %v40, 0
    %v66 = vsel %vm55, %v41, 0
    %v69 = vsel %vm55, %v42, 0
    %v72 = vsel %vm55, %v43, 0
    %v75 = vsel %vm55, %v44, 0
    %v78 = vsel %vm55, %v45, 0
    %v81 = vsel %vm55, %v46, 0
    %v84 = vsel %vm55, %v47, 0
    %v87 = vsel %vm55, %v48, 0
    %v90 = vsel %vm55, %v49, 0
    %v93 = vsel %vm55, %v50, 0
    %v96 = vsel %vm55, %v51, 0
    %v99 = vsel %vm55, %v52, 0
    %v102 = vsel %vm55, %v53, 0
    %v105 = vsel %vm55, %v54, 0
    %107 = vmatpush.xpose.msra.mxu0 %v105
    %108 = vmatpush.xpose.msra.mxu0 %v102
    %109 = vmatpush.xpose.msra.mxu0 %v99
    %110 = vmatpush.xpose.msra.mxu0 %v96
    %111 = vmatpush.xpose.msra.mxu0 %v93
    %112 = vmatpush.xpose.msra.mxu0 %v90
    %113 = vmatpush.xpose.msra.mxu0 %v87
    %114 = vmatpush.xpose.msra.mxu0 %v84
    %115 = vmatpush.xpose.msra.mxu0 %v81
    %116 = vmatpush.xpose.msra.mxu0 %v78
    %117 = vmatpush.xpose.msra.mxu0 %v75
    %118 = vmatpush.xpose.msra.mxu0 %v72
    %119 = vmatpush.xpose.msra.mxu0 %v69
    %120 = vmatpush.xpose.msra.mxu0 %v66
    %121 = vmatpush.xpose.msra.mxu0 %v63
    %122 = vmatpush.xpose.msra.mxu0 %v60
    %123 = vmatmul.f32.gmra.mxu0 %v57
    %v124 = vpop.f32.mrf.mxu0
    %v125 = vadd.f32 0.0, %v124
    %126 = vdwg.mxu0
    %v127 = vadd.f32 %v37, %v125
    %128 = vst [vmem:[#allocation2] sm:$0x1] %v127
    // Predicated region
    $region22: #{tpu_custom_call.1} parent=1 // pred_check
      %p129 = pneg %p32
    $region23: #{tpu_custom_call.1} parent=1 // pred_check_branch
      %131 = sbr.rel (%p129) target = $region25
    $region24: #{tpu_custom_call.1} parent=1 // pred_region
      %v132 = vld [vmem:[#allocation2] sm:$0x1]
      %s133 = sld [smem:[#allocation3]]
      %v134 = vstv %s133
      %v135 = vadd.f32 %v132, %v134
      %136 = vst [vmem:[#allocation7] sm:$0x1] %v135
    $region25: #{tpu_custom_call.1} parent=1 // pred_fallthru
      _
    // Predicated region
    $region26: #{tpu_custom_call.1} parent=1 // pred_check
      _
    $region27: #{tpu_custom_call.1} parent=1 // pred_check_branch
      %138 = sbr.rel (0) target = $region29
    $region28: #{tpu_custom_call.1} parent=1 // pred_region
      %140 = vsyncadd [#allocation6], 0
      %s142 = sshll.u32 [#allocation7], 4
      %s143 = int_to_ptr.vmem [resolvable:$true] %s142
      %s144 = sshll.u32 %s3, 4
      %s145 = int_to_ptr.hbm [resolvable:$true] %s144
      %147 = dma.vmem_to_hbm [thread:$0]  %s143, 16, %s145, [#allocation6]
    $region29: #{tpu_custom_call.1} parent=1 // pred_fallthru
      _
    // Predicated region
    $region30: #{tpu_custom_call.1} parent=1 // pred_check
      _
    $region31: #{tpu_custom_call.1} parent=1 // pred_check_branch
      %149 = sbr.rel (0) target = $region33
    $region32: #{tpu_custom_call.1} parent=1 // pred_region
      %151 = dma.done [#allocation6], 16
    $region33: #{tpu_custom_call.1} parent=1 // pred_fallthru
      _
    %152 = vsyncpa [#allocation5], 1
    %153 = vsyncpa [#allocation6], 1

</llo_original>
